<compile_context>
chip_gen: v5e
topology: v5e:2x2
jax: 0.10.0
libtpu: 0.0.40
codegen_flags: <defaults>
</compile_context>

<pallas_src>
import jax
import jax.numpy as jnp
from jax.experimental import pallas as pl
from jax.experimental.pallas import tpu as pltpu

_LANES = 128


def _softsign_mod_kernel(x_ref, o_ref):
    shift = jnp.asarray(0.5, dtype=x_ref.dtype)
    one = jnp.asarray(1.0, dtype=x_ref.dtype)
    shifted = x_ref[...] - shift
    # Memory-bound elementwise kernel: keep compute simple; it hides under the DMA.
    o_ref[...] = shifted / (one + jnp.abs(shifted))


def softsign_mod(x: jax.Array, *, target_block_bytes: int = 2 * 1024 * 1024) -> jax.Array:
    """Applies (x - 0.5) / (1 + |x - 0.5|) elementwise via a Pallas TPU kernel."""
    orig_shape = x.shape
    dtype = x.dtype
    itemsize = jnp.dtype(dtype).itemsize

    total = x.size
    rows = pl.cdiv(total, _LANES)
    padded_total = rows * _LANES
    needs_pad = padded_total != total

    x_flat = jnp.ravel(x)
    if needs_pad:
        # Ragged tail (< 128 elements): pad once; padded region is sliced off after the
        # kernel so f(0) = -1/3 never leaks into the result.
        x_flat = jnp.pad(x_flat, (0, padded_total - total))
    x2d = x_flat.reshape(rows, _LANES)  # pure metadata reshape when not padded

    # Packed-sublane multiple for this dtype (8 for 32-bit, 16 for bf16, 32 for 8-bit).
    sublane = max(8, 32 // itemsize)

    # Row tile from a byte budget (~2 MiB/block), rounded down to the sublane multiple.
    tile_rows = (target_block_bytes // (_LANES * itemsize)) // sublane * sublane
    tile_rows = max(tile_rows, sublane)

    if tile_rows >= rows:
        # Single block equal to the full array dims (allowed even if rows % 8 != 0).
        tile_rows = rows
        grid = (1,)
    else:
        # Partial last block is masked by Pallas; no tile shrinking, no row padding.
        grid = (pl.cdiv(rows, tile_rows),)

    out2d = pl.pallas_call(
        _softsign_mod_kernel,
        out_shape=jax.ShapeDtypeStruct((rows, _LANES), dtype),
        grid_spec=pltpu.PrefetchScalarGridSpec(
            num_scalar_prefetch=0,
            grid=grid,
            in_specs=[pl.BlockSpec((tile_rows, _LANES), lambda i: (i, 0))],
            out_specs=pl.BlockSpec((tile_rows, _LANES), lambda i: (i, 0)),
        ),
        compiler_params=pltpu.CompilerParams(
            dimension_semantics=("parallel",),
        ),
    )(x2d)

    if needs_pad:
        return out2d.reshape(-1)[:total].reshape(orig_shape)
    return out2d.reshape(orig_shape)  # pure metadata reshape back


def softsign_mod_ref(x: jax.Array) -> jax.Array:
    shifted = x - 0.5
    return shifted / (1.0 + jnp.abs(shifted))


if __name__ == "__main__":
    key = jax.random.PRNGKey(0)
    # Small NCHW-style input consistent with typical module usage.
    x = jax.random.normal(key, (2, 4, 16, 16), dtype=jnp.float32)

    out = softsign_mod(x)
    out = jax.block_until_ready(out)

    ref = softsign_mod_ref(x)
    assert out.shape == x.shape and out.dtype == x.dtype
    assert jnp.allclose(out, ref, atol=1e-6, rtol=1e-6), "mismatch vs reference"

    # Also exercise a larger, non-tile-multiple size to hit the multi-block / ragged path.
    x2 = jax.random.normal(jax.random.PRNGKey(1), (3, 7, 33, 65), dtype=jnp.float32)
    out2 = jax.block_until_ready(softsign_mod(x2))
    assert jnp.allclose(out2, softsign_mod_ref(x2), atol=1e-6, rtol=1e-6), "mismatch (ragged)"

    print("KERNEL_OK")
</pallas_src>

<mosaic_0001>
module attributes {stable_mosaic.version = 11 : i64} {
  func.func @_softsign_mod_kernel(%arg0: i32, %arg1: memref<16x128xf32, #tpu.memory_space<vmem>>, %arg2: memref<16x128xf32, #tpu.memory_space<vmem>>) attributes {dimension_semantics = [#tpu.dimension_semantics<parallel>], iteration_bounds = array<i64: 1>, scalar_prefetch = 0 : i64, scratch_operands = 0 : i64, tpu.core_type = #tpu.core_type<tc>, window_params = [{transform_indices = @transform_0, window_bounds = array<i64: 16, 128>}, {transform_indices = @transform_1, window_bounds = array<i64: 16, 128>}]} {
    %c0 = arith.constant 0 : index
    %c0_0 = arith.constant 0 : index
    %0 = vector.load %arg1[%c0, %c0_0] : memref<16x128xf32, #tpu.memory_space<vmem>>, vector<16x128xf32>
    %cst = arith.constant 5.000000e-01 : f32
    %1 = vector.broadcast %cst : f32 to vector<16x128xf32>
    %2 = arith.subf %0, %1 : vector<16x128xf32>
    %3 = math.absf %2 : vector<16x128xf32>
    %cst_1 = arith.constant 1.000000e+00 : f32
    %4 = vector.broadcast %cst_1 : f32 to vector<16x128xf32>
    %5 = arith.addf %4, %3 : vector<16x128xf32>
    %6 = arith.divf %2, %5 : vector<16x128xf32>
    %c0_2 = arith.constant 0 : index
    %c0_3 = arith.constant 0 : index
    %7 = vector.load %arg2[%c0_2, %c0_3] : memref<16x128xf32, #tpu.memory_space<vmem>>, vector<16x128xf32>
    tpu.vector_store %arg2[%c0_2, %c0_3], %6 {strides = array<i32>} : memref<16x128xf32, #tpu.memory_space<vmem>>, vector<16x128xf32>,
    return
  }
  func.func @transform_0(%arg0: i32) -> (i32, i32) {
    %c0_i32 = arith.constant 0 : i32
    %c0_i32_0 = arith.constant 0 : i32
    return %arg0, %c0_i32 : i32, i32
  }
  func.func @transform_1(%arg0: i32) -> (i32, i32) {
    %c0_i32 = arith.constant 0 : i32
    %c0_i32_0 = arith.constant 0 : i32
    return %arg0, %c0_i32 : i32, i32
  }
}

</mosaic_0001>

<llo_original>
// kernel: tpu_custom_call.1
$region0: #{tpu_custom_call.1}
  #allocation0 [shape = 'u32[]', space=smem, size = 0x4, offset = 0x4, fixed_abs, tag = 'smem constant byte address 0x4 - core index']
  #allocation1 [shape = 'u32[72,128]{1,0:T(1,128)}', space=vmem, size = 0x9000, scoped, tag = 'internal scratch']
  %s0 = inlined_call_operand.hbm [shape: f32[16,128], index: 0, kind: input, shape index: {}]
  %s1 = inlined_call_operand.hbm [shape: f32[16,128], index: 1, kind: output, shape index: {}]
  %s2 = sld [smem:[#allocation0]]
  $region18: #{tpu_custom_call.1} parent=0
    _
  %s4 = ssub.s32 1, %s2
  %s5 = scalar_select 0, %s4, %s2
  $region1: #{tpu_custom_call.1} parent=0
    #allocation2 [shape = 'u8[8192]{0}', space=vmem, size = 0x2000, scoped, tag = 'input window, operand 0, single buffered']
    #allocation3 [shape = 's32[1]{0}', space=sflag, size = 0x4, scoped, tag = 'scoped memory for tpu_custom_call.1']
    #allocation4 [shape = 's32[1]{0}', space=sflag, size = 0x4, scoped, tag = 'scoped memory for tpu_custom_call.1']
    #allocation5 [shape = 'u8[8192]{0}', space=vmem, size = 0x2000, scoped, tag = 'output window, operand 0, single buffered']
    %6 = vsyncpa [#allocation3], 0
    %7 = vsyncpa [#allocation4], 0
    // Predicated region
    $region2: #{tpu_custom_call.1} parent=1 // pred_check
      _
    $region3: #{tpu_custom_call.1} parent=1 // pred_check_branch
      %9 = sbr.rel (0) target = $region5
    $region4: #{tpu_custom_call.1} parent=1 // pred_region
      %11 = vsyncadd [#allocation3], 0
      %s12 = sshll.u32 %s0, 4
      %s13 = int_to_ptr.hbm [resolvable:$true] %s12
      %s14 = sshll.u32 [#allocation2], 4
      %s15 = int_to_ptr.vmem [resolvable:$true] %s14
      %20 = dma.hbm_to_vmem [thread:$0]  %s13, 256, %s15, [#allocation3], 128, 128, 8
    $region5: #{tpu_custom_call.1} parent=1 // pred_fallthru
      _
    // Predicated region
    $region6: #{tpu_custom_call.1} parent=1 // pred_check
      _
    $region7: #{tpu_custom_call.1} parent=1 // pred_check_branch
      %22 = sbr.rel (0) target = $region9
    $region8: #{tpu_custom_call.1} parent=1 // pred_region
      %24 = dma.done [#allocation3], 256
    $region9: #{tpu_custom_call.1} parent=1 // pred_fallthru
      _
    %v25 = vld [vmem:[#allocation2] sm:$0xff]
    %v26 = vld [vmem:[#allocation2 + $0x8] sm:$0xff]
    %v27 = vsub.f32 %v25, 0.5
    %v28 = vsub.f32 %v26, 0.5
    %v29 = vand.u32 2147483647, %v27
    %v30 = vand.u32 2147483647, %v28
    %v31 = vadd.f32 %v29, 1.0
    %v32 = vadd.f32 %v30, 1.0
    %v33 = vrcp.pop %v31
    %v34 = vmul.f32 %v31, %v33
    %v35 = vsub.f32 1.0, %v34
    %v36 = vmul.f32 %v33, %v35
    %v37 = vadd.f32 %v33, %v36
    %vm38 = vweird.f32 %v31
    %vm39 = vweird.f32 %v33
    %vm40 = vmor %vm38, %vm39
    %v41 = vsel %vm40, %v33, %v37
    %v42 = vand.u32 2147483647, %v31
    %vm43 = vcmp.eq.f32.partialorder %v42, 8.507059e+37
    %v44 = vand.u32 %v31, 2147483648
    %v45 = vor.u32 1.1754944e-38, %v44
    %v46 = vsel %vm43, %v45, %v41
    %v47 = vmul.f32 %v27, %v46
    %v48 = vrcp.pop %v32
    %v49 = vmul.f32 %v32, %v48
    %v50 = vsub.f32 1.0, %v49
    %v51 = vmul.f32 %v48, %v50
    %v52 = vadd.f32 %v48, %v51
    %vm53 = vweird.f32 %v32
    %vm54 = vweird.f32 %v48
    %vm55 = vmor %vm53, %vm54
    %v56 = vsel %vm55, %v48, %v52
    %v57 = vand.u32 2147483647, %v32
    %vm58 = vcmp.eq.f32.partialorder %v57, 8.507059e+37
    %v59 = vand.u32 %v32, 2147483648
    %v60 = vor.u32 1.1754944e-38, %v59
    %v61 = vsel %vm58, %v60, %v56
    %v62 = vmul.f32 %v28, %v61
    %63 = vst [vmem:[#allocation5] sm:$0xff] %v47
    %64 = vst [vmem:[#allocation5 + $0x8] sm:$0xff] %v62
    // Predicated region
    $region10: #{tpu_custom_call.1} parent=1 // pred_check
      _
    $region11: #{tpu_custom_call.1} parent=1 // pred_check_branch
      %66 = sbr.rel (0) target = $region13
    $region12: #{tpu_custom_call.1} parent=1 // pred_region
      %68 = vsyncadd [#allocation4], 0
      %s69 = sshll.u32 [#allocation5], 4
      %s70 = int_to_ptr.vmem [resolvable:$true] %s69
      %s71 = sshll.u32 %s1, 4
      %s72 = int_to_ptr.hbm [resolvable:$true] %s71
      %77 = dma.vmem_to_hbm [thread:$0]  %s70, 256, %s72, [#allocation4], 128, 128, 8
    $region13: #{tpu_custom_call.1} parent=1 // pred_fallthru
      _
    // Predicated region
    $region14: #{tpu_custom_call.1} parent=1 // pred_check
      _
    $region15: #{tpu_custom_call.1} parent=1 // pred_check_branch
      %79 = sbr.rel (0) target = $region17
    $region16: #{tpu_custom_call.1} parent=1 // pred_region
      %81 = dma.done [#allocation4], 256
    $region17: #{tpu_custom_call.1} parent=1 // pred_fallthru
      _
    %82 = vsyncpa [#allocation3], 1
    %83 = vsyncpa [#allocation4], 1

</llo_original>
